<compile_context>
chip_gen: v5e
topology: v5e:2x2
jax: 0.10.0
libtpu: 0.0.40
codegen_flags: <defaults>
</compile_context>

<pallas_src>
import math

import jax
import jax.numpy as jnp
import numpy as np
from jax.experimental import pallas as pl
from jax.experimental.pallas import tpu as pltpu


def _round_up(a, b):
    return (a + b - 1) // b * b


# --------------------------------------------------------------------------- #
# Kernel: one (tn, tno) output tile, reduced over the K (= D_in) grid axis.    #
# --------------------------------------------------------------------------- #
def triple_lora_kernel(x_ref, wt_ref, m_ref, a_ref, b_ref, o_ref, acc_ref):
    """
    x_ref  : (tn,  tk )  bf16   token tile (K-slice of features)
    wt_ref : (tk,  tno)  bf16   pre-transposed frozen weight tile (D_in x D_out)
    m_ref  : (tn,  R  )  bf16   per-token masks, pre-broadcast to rank width
    a_ref  : (tk,  R  )  bf16   concatenated LoRA A  [A_cl | A_lm | A_cl']
    b_ref  : (R,   tno)  bf16   concatenated LoRA B, pre-scaled by 2
    o_ref  : (tn,  tno)  bf16   output tile
    acc_ref: (tn,  tno)  f32    accumulator, resident across the K axis
    """
    k = pl.program_id(2)

    @pl.when(k == 0)
    def _():
        acc_ref[...] = jnp.zeros_like(acc_ref)

    x = x_ref[...]

    # base: plain (M,K)x(K,N) MXU matmul on the pre-transposed weight (f32 acc).
    base = jnp.dot(x, wt_ref[...], preferred_element_type=jnp.float32)

    # fused LoRA: mask the rank-R intermediate per token ((x*m)@A == (x@A)*m for
    # per-token scalar masks), then one skinny (tn,R)x(R,tno) matmul.
    t = jnp.dot(x, a_ref[...], preferred_element_type=jnp.float32)
    t = t.astype(jnp.bfloat16) * m_ref[...]
    lora = jnp.dot(t, b_ref[...], preferred_element_type=jnp.float32)

    acc_ref[...] += base + lora

    @pl.when(k == pl.num_programs(2) - 1)
    def _():
        o_ref[...] = acc_ref[...].astype(o_ref.dtype)


# --------------------------------------------------------------------------- #
# One-time packing of the frozen weight + LoRA matrices (cache and reuse).     #
# --------------------------------------------------------------------------- #
def pack_triple_lora_params(weight, params, *, tno=512, tk=2048):
    D_out, D_in = weight.shape

    tno = min(tno, _round_up(D_out, 128))       # lane-dense, never whole-D_out
    d_out_pad = _round_up(D_out, tno)
    tk = D_in if D_in <= tk else tk             # single K step for moderate D_in
    d_in_pad = _round_up(D_in, tk)

    a_list, b_list, ranks = [], [], []
    for a_key, b_key in (("lora_A_cl", "lora_B_cl"),
                         ("lora_A_lm", "lora_B_lm"),
                         ("lora_A_cl_prime", "lora_B_cl_prime")):
        a = params[a_key].astype(jnp.bfloat16)
        b = params[b_key].astype(jnp.bfloat16)
        ranks.append(a.shape[1])
        a_list.append(a)
        b_list.append(b * jnp.bfloat16(2.0))    # scale=2 folded in (exact)
    a_cat = jnp.concatenate(a_list, axis=1)     # (D_in, R)
    b_cat = jnp.concatenate(b_list, axis=0)     # (R, D_out)
    R = a_cat.shape[1]

    w_t = jnp.transpose(weight.astype(jnp.bfloat16))                    # (D_in, D_out)
    w_t = jnp.pad(w_t, ((0, d_in_pad - D_in), (0, d_out_pad - D_out)))
    a_cat = jnp.pad(a_cat, ((0, d_in_pad - D_in), (0, 0)))
    b_cat = jnp.pad(b_cat, ((0, 0), (0, d_out_pad - D_out)))

    return dict(w_t=w_t, a_cat=a_cat, b_cat=b_cat, ranks=tuple(ranks), R=R,
                D_in=D_in, D_out=D_out, d_in_pad=d_in_pad, d_out_pad=d_out_pad,
                tno=tno, tk=tk)


_MASK_KEYS = ("cl_mask", "lm_mask", "cl_prime_mask")


def triple_lora_forward(x, masks, packed, *, tn=256):
    """x: (B, S, D_in) bf16; masks: dict of optional (B, S, 1) per-token masks;
    packed: output of pack_triple_lora_params. Missing mask == branch skipped."""
    B, S, D_in = x.shape
    assert D_in == packed["D_in"], "input feature dim mismatch"
    D_out = packed["D_out"]
    d_in_pad, d_out_pad = packed["d_in_pad"], packed["d_out_pad"]
    tk, tno, R = packed["tk"], packed["tno"], packed["R"]
    N = B * S

    # ---- token tile (multiple of 16 so bf16 vregs are fully packed) --------
    tn = max(16, min(tn, _round_up(N, 16)))
    n_pad = _round_up(N, tn)

    x2 = x.reshape(N, D_in).astype(jnp.bfloat16)
    x2 = jnp.pad(x2, ((0, n_pad - N), (0, d_in_pad - D_in)))

    # ---- per-token masks, broadcast only to rank width (tiny (N, R)) -------
    cols = []
    for key, r in zip(_MASK_KEYS, packed["ranks"]):
        m = masks.get(key)
        if m is None:
            col = jnp.zeros((N, 1), jnp.bfloat16)      # absent mask == skip branch
        else:
            assert m.shape[:2] == (B, S) and (m.ndim == 2 or m.shape[-1] == 1), \
                "masks must be per-token scalars (B, S, 1)"
            col = m.reshape(N, 1).astype(jnp.bfloat16)
        cols.append(jnp.broadcast_to(col, (N, r)))
    m_cat = jnp.concatenate(cols, axis=1)
    m_cat = jnp.pad(m_cat, ((0, n_pad - N), (0, 0)))

    # ---- grid: choose axis order that minimises HBM re-streaming -----------
    nt, no, nk = n_pad // tn, d_out_pad // tno, d_in_pad // tk
    w_bytes = d_out_pad * d_in_pad * 2
    x_bytes = n_pad * d_in_pad * 2
    if nk == 1:
        token_outer = (x_bytes + nt * w_bytes) <= (w_bytes + no * x_bytes)
    else:
        token_outer = True   # with a real K axis the order no longer changes traffic

    if token_outer:
        tok = lambda i, j: i
        dou = lambda i, j: j
        grid = (nt, no, nk)
    else:
        tok = lambda i, j: j
        dou = lambda i, j: i
        grid = (no, nt, nk)

    in_specs = [
        pl.BlockSpec((tn, tk),  lambda i, j, k: (tok(i, j), k)),    # x tile
        pl.BlockSpec((tk, tno), lambda i, j, k: (k, dou(i, j))),    # W.T tile
        pl.BlockSpec((tn, R),   lambda i, j, k: (tok(i, j), 0)),    # per-token masks
        pl.BlockSpec((tk, R),   lambda i, j, k: (k, 0)),            # A_cat
        pl.BlockSpec((R, tno),  lambda i, j, k: (0, dou(i, j))),    # B_cat (x2)
    ]
    out_specs = pl.BlockSpec((tn, tno), lambda i, j, k: (tok(i, j), dou(i, j)))

    # ---- VMEM budget: per-generation capacity minus ~15% headroom ----------
    try:
        vmem_cap = int(pltpu.get_tpu_info().vmem_capacity_bytes)
    except Exception:
        vmem_cap = 64 << 20            # conservative (v7x) fallback
    budget = int(vmem_cap * 0.85)
    tile_bytes = (2 * 2 * (tn * tk + tk * tno + tn * R + tk * R + R * tno)  # dbl-buf inputs
                  + 2 * 2 * tn * tno                                        # dbl-buf output
                  + 4 * tn * tno)                                           # f32 accumulator
    vmem_limit = int(min(budget, max(32 << 20, tile_bytes + (8 << 20))))

    # ---- advisory cost with the real re-stream counts ----------------------
    w_reads = 1 if (not token_outer and nk == 1) else nt
    x_reads = 1 if (token_outer and nk == 1) else no
    flops = (2 * n_pad * d_in_pad * d_out_pad
             + 2 * n_pad * R * d_in_pad + 2 * n_pad * R * d_out_pad * nk)
    bytes_accessed = (w_reads * w_bytes
                      + x_reads * (x_bytes + n_pad * R * 2)
                      + no * d_in_pad * R * 2
                      + nt * R * d_out_pad * 2
                      + n_pad * d_out_pad * 2)

    out = pl.pallas_call(
        triple_lora_kernel,
        out_shape=jax.ShapeDtypeStruct((n_pad, d_out_pad), jnp.bfloat16),
        grid_spec=pltpu.PrefetchScalarGridSpec(
            num_scalar_prefetch=0,
            grid=grid,
            in_specs=in_specs,
            out_specs=out_specs,
            scratch_shapes=[pltpu.VMEM((tn, tno), jnp.float32)],
        ),
        compiler_params=pltpu.CompilerParams(
            dimension_semantics=("parallel", "parallel", "arbitrary"),
            vmem_limit_bytes=vmem_limit,
        ),
        cost_estimate=pl.CostEstimate(
            flops=int(flops), transcendentals=0, bytes_accessed=int(bytes_accessed)),
    )(x2, packed["w_t"], m_cat, packed["a_cat"], packed["b_cat"])

    return out[:N, :D_out].reshape(B, S, D_out)


def reference_forward(x, weight, masks, params):
    """Pure-JAX reference mirroring the PyTorch bf16 per-stage rounding."""
    def mm(a, b):
        return jnp.dot(a, b, preferred_element_type=jnp.float32).astype(jnp.bfloat16)

    res = mm(x, weight.T)
    for key, a, b in (("cl_mask", "lora_A_cl", "lora_B_cl"),
                      ("lm_mask", "lora_A_lm", "lora_B_lm"),
                      ("cl_prime_mask", "lora_A_cl_prime", "lora_B_cl_prime")):
        if key in masks:
            xm = (x * masks[key]).astype(jnp.bfloat16)
            res = res + jnp.bfloat16(2.0) * mm(mm(xm, params[a]), params[b])
    return res


if __name__ == "__main__":
    key = jax.random.PRNGKey(0)

    def kaiming_uniform(k, shape):
        # torch kaiming_uniform_(a=sqrt(5)) on (in_features, r): bound = 1/sqrt(r)
        bound = 1.0 / math.sqrt(shape[1])
        return jax.random.uniform(k, shape, jnp.float32, -bound, bound).astype(jnp.bfloat16)

    def run_case(case_key, batch, seq, in_features, out_features, r, drop_mask=None):
        ks = jax.random.split(case_key, 12)
        x = jax.random.normal(ks[0], (batch, seq, in_features), jnp.float32).astype(jnp.bfloat16)
        weight = (0.05 * jax.random.normal(ks[1], (out_features, in_features),
                                           jnp.float32)).astype(jnp.bfloat16)
        # NOTE: the module inits lora_B_* to zeros; small random values are used
        # here so the LoRA branches actually exercise the compute path.
        params = {
            "lora_A_cl": kaiming_uniform(ks[2], (in_features, r)),
            "lora_B_cl": (0.05 * jax.random.normal(ks[3], (r, out_features))).astype(jnp.bfloat16),
            "lora_A_lm": kaiming_uniform(ks[4], (in_features, r)),
            "lora_B_lm": (0.05 * jax.random.normal(ks[5], (r, out_features))).astype(jnp.bfloat16),
            "lora_A_cl_prime": kaiming_uniform(ks[6], (in_features, r)),
            "lora_B_cl_prime": (0.05 * jax.random.normal(ks[7], (r, out_features))).astype(jnp.bfloat16),
        }
        masks = {
            "cl_mask": (jax.random.uniform(ks[8], (batch, seq, 1)) > 0.5).astype(jnp.bfloat16),
            "lm_mask": (jax.random.uniform(ks[9], (batch, seq, 1)) > 0.5).astype(jnp.bfloat16),
            "cl_prime_mask": (jax.random.uniform(ks[10], (batch, seq, 1)) > 0.5).astype(jnp.bfloat16),
        }
        if drop_mask is not None:
            masks.pop(drop_mask)

        packed = pack_triple_lora_params(weight, params)   # one-time packing (cacheable)
        out = jax.block_until_ready(triple_lora_forward(x, masks, packed))
        ref = reference_forward(x, weight, masks, params)
        np.testing.assert_allclose(np.asarray(out, np.float32), np.asarray(ref, np.float32),
                                   rtol=5e-2, atol=5e-2)
        assert out.shape == (batch, seq, out_features) and out.dtype == jnp.bfloat16

    k1, k2 = jax.random.split(key)
    # Small shape consistent with the module defaults.
    run_case(k1, batch=2, seq=8, in_features=128, out_features=128, r=16)
    # Non-multiple D_out exercises the padded output tiling + a skipped mask branch.
    run_case(k2, batch=2, seq=24, in_features=256, out_features=300, r=16,
             drop_mask="cl_prime_mask")

    print("KERNEL_OK")
</pallas_src>

<mosaic_0001>
module attributes {stable_mosaic.version = 11 : i64} {
  func.func @triple_lora_kernel(%arg0: i32, %arg1: i32, %arg2: i32, %arg3: memref<16x128xbf16, #tpu.memory_space<vmem>>, %arg4: memref<128x128xbf16, #tpu.memory_space<vmem>>, %arg5: memref<16x48xbf16, #tpu.memory_space<vmem>>, %arg6: memref<128x48xbf16, #tpu.memory_space<vmem>>, %arg7: memref<48x128xbf16, #tpu.memory_space<vmem>>, %arg8: memref<16x128xbf16, #tpu.memory_space<vmem>>, %arg9: memref<16x128xf32, #tpu.memory_space<vmem>>) attributes {dimension_semantics = [#tpu.dimension_semantics<parallel>, #tpu.dimension_semantics<parallel>, #tpu.dimension_semantics<arbitrary>], iteration_bounds = array<i64: 1, 1, 1>, scalar_prefetch = 0 : i64, scratch_operands = 1 : i64, tpu.core_type = #tpu.core_type<tc>, window_params = [{transform_indices = @transform_0, window_bounds = array<i64: 16, 128>}, {transform_indices = @transform_1, window_bounds = array<i64: 128, 128>}, {transform_indices = @transform_2, window_bounds = array<i64: 16, 48>}, {transform_indices = @transform_3, window_bounds = array<i64: 128, 48>}, {transform_indices = @transform_4, window_bounds = array<i64: 48, 128>}, {transform_indices = @transform_5, window_bounds = array<i64: 16, 128>}]} {
    %c0_i32 = arith.constant 0 : i32
    %0 = arith.cmpi eq, %arg2, %c0_i32 : i32
    %1 = arith.extui %0 : i1 to i32
    %c0_i32_0 = arith.constant 0 : i32
    %2 = arith.cmpi ne, %1, %c0_i32_0 : i32
    scf.if %2 {
      %cst_18 = arith.constant 0.000000e+00 : f32
      %20 = vector.broadcast %cst_18 : f32 to vector<16x128xf32>
      %c0_19 = arith.constant 0 : index
      %c0_20 = arith.constant 0 : index
      %21 = vector.load %arg9[%c0_19, %c0_20] : memref<16x128xf32, #tpu.memory_space<vmem>>, vector<16x128xf32>
      tpu.vector_store %arg9[%c0_19, %c0_20], %20 {strides = array<i32>} : memref<16x128xf32, #tpu.memory_space<vmem>>, vector<16x128xf32>,
    } else {
    }
    %c0 = arith.constant 0 : index
    %c0_1 = arith.constant 0 : index
    %3 = vector.load %arg3[%c0, %c0_1] : memref<16x128xbf16, #tpu.memory_space<vmem>>, vector<16x128xbf16>
    %c0_2 = arith.constant 0 : index
    %c0_3 = arith.constant 0 : index
    %4 = vector.load %arg4[%c0_2, %c0_3] : memref<128x128xbf16, #tpu.memory_space<vmem>>, vector<128x128xbf16>
    %cst = arith.constant dense<0.000000e+00> : vector<16x128xf32>
    %5 = tpu.matmul %3, %4, %cst {dimension_numbers = #tpu.dot_dimension_numbers<[1], [0], [0], [1], [0, 0, 1, 1], [], []>} : vector<16x128xbf16>, vector<128x128xbf16>, vector<16x128xf32> -> vector<16x128xf32>
    %c0_4 = arith.constant 0 : index
    %c0_5 = arith.constant 0 : index
    %6 = vector.load %arg6[%c0_4, %c0_5] : memref<128x48xbf16, #tpu.memory_space<vmem>>, vector<128x48xbf16>
    %cst_6 = arith.constant dense<0.000000e+00> : vector<16x48xf32>
    %7 = tpu.matmul %3, %6, %cst_6 {dimension_numbers = #tpu.dot_dimension_numbers<[1], [0], [0], [1], [0, 0, 1, 1], [], []>} : vector<16x128xbf16>, vector<128x48xbf16>, vector<16x48xf32> -> vector<16x48xf32>
    %8 = arith.truncf %7 : vector<16x48xf32> to vector<16x48xbf16>
    %c0_7 = arith.constant 0 : index
    %c0_8 = arith.constant 0 : index
    %9 = vector.load %arg5[%c0_7, %c0_8] : memref<16x48xbf16, #tpu.memory_space<vmem>>, vector<16x48xbf16>
    %10 = arith.mulf %8, %9 : vector<16x48xbf16>
    %c0_9 = arith.constant 0 : index
    %c0_10 = arith.constant 0 : index
    %11 = vector.load %arg7[%c0_9, %c0_10] : memref<48x128xbf16, #tpu.memory_space<vmem>>, vector<48x128xbf16>
    %cst_11 = arith.constant dense<0.000000e+00> : vector<16x128xf32>
    %12 = tpu.matmul %10, %11, %cst_11 {dimension_numbers = #tpu.dot_dimension_numbers<[1], [0], [0], [1], [0, 0, 1, 1], [], []>} : vector<16x48xbf16>, vector<48x128xbf16>, vector<16x128xf32> -> vector<16x128xf32>
    %c0_12 = arith.constant 0 : index
    %c0_13 = arith.constant 0 : index
    %13 = vector.load %arg9[%c0_12, %c0_13] : memref<16x128xf32, #tpu.memory_space<vmem>>, vector<16x128xf32>
    %14 = arith.addf %5, %12 : vector<16x128xf32>
    %15 = arith.addf %13, %14 : vector<16x128xf32>
    %c0_14 = arith.constant 0 : index
    %c0_15 = arith.constant 0 : index
    %16 = vector.load %arg9[%c0_14, %c0_15] : memref<16x128xf32, #tpu.memory_space<vmem>>, vector<16x128xf32>
    tpu.vector_store %arg9[%c0_14, %c0_15], %15 {strides = array<i32>} : memref<16x128xf32, #tpu.memory_space<vmem>>, vector<16x128xf32>,
    %c0_i32_16 = arith.constant 0 : i32
    %17 = arith.cmpi eq, %arg2, %c0_i32_16 : i32
    %18 = arith.extui %17 : i1 to i32
    %c0_i32_17 = arith.constant 0 : i32
    %19 = arith.cmpi ne, %18, %c0_i32_17 : i32
    scf.if %19 {
      %c0_18 = arith.constant 0 : index
      %c0_19 = arith.constant 0 : index
      %20 = vector.load %arg9[%c0_18, %c0_19] : memref<16x128xf32, #tpu.memory_space<vmem>>, vector<16x128xf32>
      %21 = arith.truncf %20 : vector<16x128xf32> to vector<16x128xbf16>
      %c0_20 = arith.constant 0 : index
      %c0_21 = arith.constant 0 : index
      %22 = vector.load %arg8[%c0_20, %c0_21] : memref<16x128xbf16, #tpu.memory_space<vmem>>, vector<16x128xbf16>
      tpu.vector_store %arg8[%c0_20, %c0_21], %21 {strides = array<i32>} : memref<16x128xbf16, #tpu.memory_space<vmem>>, vector<16x128xbf16>,
    } else {
    }
    return
  }
  func.func @transform_0(%arg0: i32, %arg1: i32, %arg2: i32) -> (i32, i32) {
    %c0_i32 = arith.constant 0 : i32
    return %arg0, %arg2 : i32, i32
  }
  func.func @transform_1(%arg0: i32, %arg1: i32, %arg2: i32) -> (i32, i32) {
    %c0_i32 = arith.constant 0 : i32
    return %arg2, %arg1 : i32, i32
  }
  func.func @transform_2(%arg0: i32, %arg1: i32, %arg2: i32) -> (i32, i32) {
    %c0_i32 = arith.constant 0 : i32
    %c0_i32_0 = arith.constant 0 : i32
    return %arg0, %c0_i32 : i32, i32
  }
  func.func @transform_3(%arg0: i32, %arg1: i32, %arg2: i32) -> (i32, i32) {
    %c0_i32 = arith.constant 0 : i32
    %c0_i32_0 = arith.constant 0 : i32
    return %arg2, %c0_i32 : i32, i32
  }
  func.func @transform_4(%arg0: i32, %arg1: i32, %arg2: i32) -> (i32, i32) {
    %c0_i32 = arith.constant 0 : i32
    %c0_i32_0 = arith.constant 0 : i32
    return %c0_i32, %arg1 : i32, i32
  }
  func.func @transform_5(%arg0: i32, %arg1: i32, %arg2: i32) -> (i32, i32) {
    %c0_i32 = arith.constant 0 : i32
    return %arg0, %arg1 : i32, i32
  }
}

</mosaic_0001>

<llo_original>
// kernel: tpu_custom_call.1
$region0: #{tpu_custom_call.1}
  #allocation0 [shape = 'u32[]', space=smem, size = 0x4, offset = 0x4, fixed_abs, tag = 'smem constant byte address 0x4 - core index']
  #allocation1 [shape = 'u32[72,128]{1,0:T(1,128)}', space=vmem, size = 0x9000, scoped, tag = 'internal scratch']
  #allocation2 [shape = 'f32[16,128]{1,0:T(8,128)}', space=vmem, size = 0x2000, scoped, tag = 'scratch operand']
  %s0 = inlined_call_operand.hbm [shape: bf16[16,128], index: 0, kind: input, shape index: {}]
  %s1 = inlined_call_operand.vmem [shape: bf16[128,128], index: 1, kind: input, shape index: {}]
  %s2 = inlined_call_operand.hbm [shape: bf16[16,48], index: 2, kind: input, shape index: {}]
  %s3 = inlined_call_operand.vmem [shape: bf16[128,48], index: 3, kind: input, shape index: {}]
  %s4 = inlined_call_operand.vmem [shape: bf16[48,128], index: 4, kind: input, shape index: {}]
  %s5 = inlined_call_operand.hbm [shape: bf16[16,128], index: 5, kind: output, shape index: {}]
  %s6 = sld [smem:[#allocation0]]
  $region46: #{tpu_custom_call.1} parent=0
    _
  %s8 = ssub.s32 1, %s6
  %s9 = scalar_select 0, %s8, %s6
  $region1: #{tpu_custom_call.1} parent=0
    #allocation3 [shape = 'u8[4096]{0}', space=vmem, size = 0x1000, scoped, tag = 'input window, operand 0, single buffered']
    #allocation4 [shape = 's32[1]{0}', space=sflag, size = 0x4, scoped, tag = 'scoped memory for tpu_custom_call.1']
    #allocation5 [shape = 's32[1]{0}', space=sflag, size = 0x4, scoped, tag = 'scoped memory for tpu_custom_call.1']
    #allocation6 [shape = 'u8[4096]{0}', space=vmem, size = 0x1000, scoped, tag = 'input window, operand 2, single buffered']
    #allocation7 [shape = 's32[1]{0}', space=sflag, size = 0x4, scoped, tag = 'scoped memory for tpu_custom_call.1']
    #allocation8 [shape = 'u8[4096]{0}', space=vmem, size = 0x1000, scoped, tag = 'output window, operand 0, single buffered']
    %10 = vsyncpa [#allocation4], 0
    %11 = vsyncpa [#allocation7], 0
    %12 = vsyncpa [#allocation5], 0
    // Predicated region
    $region2: #{tpu_custom_call.1} parent=1 // pred_check
      _
    $region3: #{tpu_custom_call.1} parent=1 // pred_check_branch
      %14 = sbr.rel (0) target = $region5
    $region4: #{tpu_custom_call.1} parent=1 // pred_region
      %16 = vsyncadd [#allocation4], 0
      %s17 = sshll.u32 %s0, 4
      %s18 = int_to_ptr.hbm [resolvable:$true] %s17
      %s19 = sshll.u32 [#allocation3], 4
      %s20 = int_to_ptr.vmem [resolvable:$true] %s19
      %25 = dma.hbm_to_vmem [thread:$0]  %s18, 128, %s20, [#allocation4], 64, 64, 4
    $region5: #{tpu_custom_call.1} parent=1 // pred_fallthru
      _
    // Predicated region
    $region6: #{tpu_custom_call.1} parent=1 // pred_check
      _
    $region7: #{tpu_custom_call.1} parent=1 // pred_check_branch
      %27 = sbr.rel (0) target = $region9
    $region8: #{tpu_custom_call.1} parent=1 // pred_region
      _
    $region9: #{tpu_custom_call.1} parent=1 // pred_fallthru
      _
    // Predicated region
    $region10: #{tpu_custom_call.1} parent=1 // pred_check
      _
    $region11: #{tpu_custom_call.1} parent=1 // pred_check_branch
      %29 = sbr.rel (0) target = $region13
    $region12: #{tpu_custom_call.1} parent=1 // pred_region
      %31 = vsyncadd [#allocation7], 0
      %s32 = sshll.u32 %s2, 4
      %s33 = int_to_ptr.hbm [resolvable:$true] %s32
      %s34 = sshll.u32 [#allocation6], 4
      %s35 = int_to_ptr.vmem [resolvable:$true] %s34
      %40 = dma.hbm_to_vmem [thread:$0]  %s33, 128, %s35, [#allocation7], 64, 64, 4
    $region13: #{tpu_custom_call.1} parent=1 // pred_fallthru
      _
    // Predicated region
    $region14: #{tpu_custom_call.1} parent=1 // pred_check
      _
    $region15: #{tpu_custom_call.1} parent=1 // pred_check_branch
      %42 = sbr.rel (0) target = $region17
    $region16: #{tpu_custom_call.1} parent=1 // pred_region
      _
    $region17: #{tpu_custom_call.1} parent=1 // pred_fallthru
      _
    // Predicated region
    $region18: #{tpu_custom_call.1} parent=1 // pred_check
      _
    $region19: #{tpu_custom_call.1} parent=1 // pred_check_branch
      %44 = sbr.rel (0) target = $region21
    $region20: #{tpu_custom_call.1} parent=1 // pred_region
      _
    $region21: #{tpu_custom_call.1} parent=1 // pred_fallthru
      _
    // Predicated region
    $region22: #{tpu_custom_call.1} parent=1 // pred_check
      _
    $region23: #{tpu_custom_call.1} parent=1 // pred_check_branch
      %46 = sbr.rel (0) target = $region25
    $region24: #{tpu_custom_call.1} parent=1 // pred_region
      %48 = dma.done [#allocation4], 128
    $region25: #{tpu_custom_call.1} parent=1 // pred_fallthru
      _
    // Predicated region
    $region26: #{tpu_custom_call.1} parent=1 // pred_check
      _
    $region27: #{tpu_custom_call.1} parent=1 // pred_check_branch
      %50 = sbr.rel (0) target = $region29
    $region28: #{tpu_custom_call.1} parent=1 // pred_region
      %52 = dma.done [#allocation7], 128
    $region29: #{tpu_custom_call.1} parent=1 // pred_fallthru
      _
    %p54 = scmp.eq.s32.totalorder 0, 0
    // Predicated region
    $region30: #{tpu_custom_call.1} parent=1 // pred_check
      %p55 = pneg %p54
    $region31: #{tpu_custom_call.1} parent=1 // pred_check_branch
      %57 = sbr.rel (%p55) target = $region33
    $region32: #{tpu_custom_call.1} parent=1 // pred_region
      %58 = vst [vmem:[#allocation2] sm:$0xff] 0.0
      %59 = vst [vmem:[#allocation2 + $0x8] sm:$0xff] 0.0
    $region33: #{tpu_custom_call.1} parent=1 // pred_fallthru
      _
    %v60 = vld [vmem:[#allocation3] sm:$0xf]
    %v61 = vld [vmem:[#allocation3 + $0x4] sm:$0xf]
    %v62 = vld [vmem:[%s1] sm:$0xf]
    %v63 = vld [vmem:[%s1 + $0x4] sm:$0xf]
    %v64 = vld [vmem:[%s1 + $0x8] sm:$0xf]
    %v65 = vld [vmem:[%s1 + $0xc] sm:$0xf]
    %v66 = vld [vmem:[%s1 + $0x10] sm:$0xf]
    %v67 = vld [vmem:[%s1 + $0x14] sm:$0xf]
    %v68 = vld [vmem:[%s1 + $0x18] sm:$0xf]
    %v69 = vld [vmem:[%s1 + $0x1c] sm:$0xf]
    %v70 = vld [vmem:[%s1 + $0x20] sm:$0xf]
    %v71 = vld [vmem:[%s1 + $0x24] sm:$0xf]
    %v72 = vld [vmem:[%s1 + $0x28] sm:$0xf]
    %v73 = vld [vmem:[%s1 + $0x2c] sm:$0xf]
    %v74 = vld [vmem:[%s1 + $0x30] sm:$0xf]
    %v75 = vld [vmem:[%s1 + $0x34] sm:$0xf]
    %v76 = vld [vmem:[%s1 + $0x38] sm:$0xf]
    %v77 = vld [vmem:[%s1 + $0x3c] sm:$0xf]
    %v78 = vld [vmem:[%s3] sm:$0xf]
    %v79 = vld [vmem:[%s3 + $0x4] sm:$0xf]
    %v80 = vld [vmem:[%s3 + $0x8] sm:$0xf]
    %v81 = vld [vmem:[%s3 + $0xc] sm:$0xf]
    %v82 = vld [vmem:[%s3 + $0x10] sm:$0xf]
    %v83 = vld [vmem:[%s3 + $0x14] sm:$0xf]
    %v84 = vld [vmem:[%s3 + $0x18] sm:$0xf]
    %v85 = vld [vmem:[%s3 + $0x1c] sm:$0xf]
    %v86 = vld [vmem:[%s3 + $0x20] sm:$0xf]
    %v87 = vld [vmem:[%s3 + $0x24] sm:$0xf]
    %v88 = vld [vmem:[%s3 + $0x28] sm:$0xf]
    %v89 = vld [vmem:[%s3 + $0x2c] sm:$0xf]
    %v90 = vld [vmem:[%s3 + $0x30] sm:$0xf]
    %v91 = vld [vmem:[%s3 + $0x34] sm:$0xf]
    %v92 = vld [vmem:[%s3 + $0x38] sm:$0xf]
    %v93 = vld [vmem:[%s3 + $0x3c] sm:$0xf]
    %v96 = vunpack.c.l.b16 %v60
    %v97 = vunpack.c.l.b16 %v61
    %v98 = vpack.c.b16 %v97, %v96
    %v116 = vunpack.c.l.b16 %v78
    %v117 = vunpack.c.l.b16 %v79
    %v118 = vunpack.c.l.b16 %v80
    %v119 = vunpack.c.l.b16 %v81
    %v120 = vunpack.c.l.b16 %v82
    %v121 = vunpack.c.l.b16 %v83
    %v122 = vunpack.c.l.b16 %v84
    %v123 = vunpack.c.l.b16 %v85
    %v124 = vunpack.c.l.b16 %v86
    %v125 = vunpack.c.l.b16 %v87
    %v126 = vunpack.c.l.b16 %v88
    %v127 = vunpack.c.l.b16 %v89
    %v128 = vunpack.c.l.b16 %v90
    %v129 = vunpack.c.l.b16 %v91
    %v130 = vunpack.c.l.b16 %v92
    %v131 = vunpack.c.l.b16 %v93
    %v132 = vpack.c.b16 %v117, %v116
    %v133 = vpack.c.b16 %v119, %v118
    %v134 = vpack.c.b16 %v121, %v120
    %v135 = vpack.c.b16 %v123, %v122
    %v136 = vpack.c.b16 %v125, %v124
    %v137 = vpack.c.b16 %v127, %v126
    %v138 = vpack.c.b16 %v129, %v128
    %v139 = vpack.c.b16 %v131, %v130
    %148 = vmatpush.bf16.msra.mxu0 %v139
    %149 = vmatpush.bf16.msra.mxu0 %v138
    %150 = vmatpush.bf16.msra.mxu0 %v137
    %151 = vmatpush.bf16.msra.mxu0 %v136
    %152 = vmatpush.bf16.msra.mxu0 %v135
    %153 = vmatpush.bf16.msra.mxu0 %v134
    %154 = vmatpush.bf16.msra.mxu0 %v133
    %155 = vmatpush.bf16.msra.mxu0 %v132
    %156 = vmatmul.bf16.gmra.mxu0 %v98
    %v157 = vpop.f32.mrf.mxu0
    %v158 = vadd.f32 0.0, %v157
    %v159 = vpop.f32.mrf.mxu0
    %v160 = vadd.f32 0.0, %v159
    %161 = vdwg.mxu0
    %v162 = vpack.c.bf16 %v158, %v158
    %v163 = vpack.c.bf16 %v160, %v160
    %v164 = vld [vmem:[#allocation6] sm:$0xf]
    %v165 = vld [vmem:[#allocation6 + $0x4] sm:$0xf]
    %v166 = vunpack.c.l.bf16 %v162
    %v167 = vunpack.c.l.bf16 %v163
    %v168 = vunpack.c.l.bf16 %v164
    %v169 = vunpack.c.l.bf16 %v165
    %v170 = vmul.f32 %v166, %v168
    %v171 = vmul.f32 %v167, %v169
    %v172 = vpack.c.bf16 %v171, %v170
    %v173 = vld [vmem:[%s4] sm:$0xf]
    %v174 = vld [vmem:[%s4 + $0x4] sm:$0xf]
    %v175 = vld [vmem:[%s4 + $0x8] sm:$0xf]
    %v176 = vld [vmem:[%s4 + $0xc] sm:$0xf]
    %v177 = vld [vmem:[%s4 + $0x10] sm:$0xf]
    %v178 = vld [vmem:[%s4 + $0x14] sm:$0xf]
    %v185 = vunpack.c.l.b16 %v173
    %v186 = vunpack.c.l.b16 %v174
    %v187 = vunpack.c.l.b16 %v175
    %v188 = vunpack.c.l.b16 %v176
    %v189 = vunpack.c.l.b16 %v177
    %v190 = vunpack.c.l.b16 %v178
    %v191 = vpack.c.b16 %v186, %v185
    %v192 = vpack.c.b16 %v188, %v187
    %v193 = vpack.c.b16 %v190, %v189
    %vm197 = vcmask 392192
    %v199 = vsel %vm197, %v172, 0
    %201 = vmatpush.bf16.msra.mxu0 0
    %202 = vmatpush.bf16.msra.mxu0 0
    %203 = vmatpush.bf16.msra.mxu0 0
    %204 = vmatpush.bf16.msra.mxu0 0
    %205 = vmatpush.bf16.msra.mxu0 0
    %206 = vmatpush.bf16.msra.mxu0 %v193
    %207 = vmatpush.bf16.msra.mxu0 %v192
    %208 = vmatpush.bf16.msra.mxu0 %v191
    %209 = vmatmul.bf16.gmra.mxu0 %v199
    %v210 = vpop.f32.mrf.mxu0
    %v211 = vadd.f32 0.0, %v210
    %v212 = vpop.f32.mrf.mxu0
    %v213 = vadd.f32 0.0, %v212
    %214 = vdwg.mxu0
    %v215 = vld [vmem:[#allocation2] sm:$0xff]
    %v216 = vld [vmem:[#allocation2 + $0x8] sm:$0xff]
    %v233 = vunpack.c.l.b16 %v62
    %v234 = vunpack.c.l.b16 %v63
    %v235 = vunpack.c.l.b16 %v64
    %v236 = vunpack.c.l.b16 %v65
    %v237 = vunpack.c.l.b16 %v66
    %v238 = vunpack.c.l.b16 %v67
    %v239 = vunpack.c.l.b16 %v68
    %v240 = vunpack.c.l.b16 %v69
    %v241 = vunpack.c.l.b16 %v70
    %v242 = vunpack.c.l.b16 %v71
    %v243 = vunpack.c.l.b16 %v72
    %v244 = vunpack.c.l.b16 %v73
    %v245 = vunpack.c.l.b16 %v74
    %v246 = vunpack.c.l.b16 %v75
    %v247 = vunpack.c.l.b16 %v76
    %v248 = vunpack.c.l.b16 %v77
    %v249 = vpack.c.b16 %v234, %v233
    %v250 = vpack.c.b16 %v236, %v235
    %v251 = vpack.c.b16 %v238, %v237
    %v252 = vpack.c.b16 %v240, %v239
    %v253 = vpack.c.b16 %v242, %v241
    %v254 = vpack.c.b16 %v244, %v243
    %v255 = vpack.c.b16 %v246, %v245
    %v256 = vpack.c.b16 %v248, %v247
    %265 = vmatpush.bf16.msra.mxu0 %v256
    %266 = vmatpush.bf16.msra.mxu0 %v255
    %267 = vmatpush.bf16.msra.mxu0 %v254
    %268 = vmatpush.bf16.msra.mxu0 %v253
    %269 = vmatpush.bf16.msra.mxu0 %v252
    %270 = vmatpush.bf16.msra.mxu0 %v251
    %271 = vmatpush.bf16.msra.mxu0 %v250
    %272 = vmatpush.bf16.msra.mxu0 %v249
    %273 = vmatmul.bf16.gmra.mxu0 %v98
    %v274 = vpop.f32.mrf.mxu0
    %v275 = vadd.f32 %v211, %v274
    %v276 = vpop.f32.mrf.mxu0
    %v277 = vadd.f32 %v213, %v276
    %278 = vdwg.mxu0
    %v279 = vadd.f32 %v215, %v275
    %v280 = vadd.f32 %v216, %v277
    %281 = vst [vmem:[#allocation2] sm:$0xff] %v279
    %282 = vst [vmem:[#allocation2 + $0x8] sm:$0xff] %v280
    // Predicated region
    $region34: #{tpu_custom_call.1} parent=1 // pred_check
      %p283 = pneg %p54
    $region35: #{tpu_custom_call.1} parent=1 // pred_check_branch
      %285 = sbr.rel (%p283) target = $region37
    $region36: #{tpu_custom_call.1} parent=1 // pred_region
      %v286 = vld [vmem:[#allocation2] sm:$0xff]
      %v287 = vld [vmem:[#allocation2 + $0x8] sm:$0xff]
      %v288 = vpack.c.bf16 %v286, %v286
      %v289 = vpack.c.bf16 %v287, %v287
      %290 = vst [vmem:[#allocation8] sm:$0xf] %v288
      %291 = vst [vmem:[#allocation8 + $0x4] sm:$0xf] %v289
    $region37: #{tpu_custom_call.1} parent=1 // pred_fallthru
      _
    // Predicated region
    $region38: #{tpu_custom_call.1} parent=1 // pred_check
      _
    $region39: #{tpu_custom_call.1} parent=1 // pred_check_branch
      %293 = sbr.rel (0) target = $region41
    $region40: #{tpu_custom_call.1} parent=1 // pred_region
      %295 = vsyncadd [#allocation5], 0
      %s296 = sshll.u32 [#allocation8], 4
      %s297 = int_to_ptr.vmem [resolvable:$true] %s296
      %s298 = sshll.u32 %s5, 4
      %s299 = int_to_ptr.hbm [resolvable:$true] %s298
      %304 = dma.vmem_to_hbm [thread:$0]  %s297, 128, %s299, [#allocation5], 64, 64, 4
    $region41: #{tpu_custom_call.1} parent=1 // pred_fallthru
      _
    // Predicated region
    $region42: #{tpu_custom_call.1} parent=1 // pred_check
      _
    $region43: #{tpu_custom_call.1} parent=1 // pred_check_branch
      %306 = sbr.rel (0) target = $region45
    $region44: #{tpu_custom_call.1} parent=1 // pred_region
      %308 = dma.done [#allocation5], 128
    $region45: #{tpu_custom_call.1} parent=1 // pred_fallthru
      _
    %309 = vsyncpa [#allocation4], 1
    %310 = vsyncpa [#allocation7], 1
    %311 = vsyncpa [#allocation5], 1

</llo_original>
